<compile_context>
chip_gen: v7x
topology: tpu7x:2x2x1
jax: 0.10.0
libtpu: 0.0.40
codegen_flags: <defaults>
</compile_context>

<pallas_src>
import functools

import jax
import jax.numpy as jnp
from jax.experimental import pallas as pl
from jax.experimental.pallas import tpu as pltpu

WT = jnp.bfloat16   # weight storage dtype (MXU-native)
AT = jnp.bfloat16   # wide-activation storage dtype (qkv / ctx / mlp hidden)


def _hw_defaults():
    """(vmem_limit_bytes, preferred M-tile) gated per generation.
    v5e/v6e have 128 MiB physical VMEM and the lowest HBM BW -> big tiles + big budget.
    v7x has 64 MiB per TC and 3.2 TB/s HBM -> stay conservative, lean on fusion."""
    try:
        cap = int(getattr(pltpu.get_tpu_info(), "vmem_capacity_bytes", 0))
    except Exception:
        cap = 0
    if cap >= 96 * 1024 * 1024:
        return 96 * 1024 * 1024, 512
    return 48 * 1024 * 1024, 256


VMEM_LIMIT, TILE_PREF = _hw_defaults()


def _tile(dim, pref, align):
    """Largest divisor of `dim` that is <= pref and a multiple of `align`;
    falls back to the full dim (a full-extent block is always legal)."""
    if dim <= pref:
        return dim
    if dim % align:
        return dim
    t = (pref // align) * align
    while t >= align:
        if dim % t == 0:
            return t
        t -= align
    return dim


def _bf16(x):
    return x if x.dtype == jnp.bfloat16 else x.astype(jnp.bfloat16)


# --------------------------------------------------------------------------
# Kernels
# --------------------------------------------------------------------------

def _linear_kernel(x_ref, w_ref, b_ref, o_ref, *, act):
    """o = act(x @ w + b). Used for patch embedding."""
    y = jnp.dot(_bf16(x_ref[...]), w_ref[...], preferred_element_type=jnp.float32)
    y = y + b_ref[...]
    if act == "relu":
        y = jnp.maximum(y, 0.0)
    elif act == "gelu":
        y = jax.nn.gelu(y, approximate=False)
    o_ref[...] = y.astype(o_ref.dtype)


def _ln_linear_kernel(x_ref, g_ref, beta_ref, w_ref, b_ref, o_ref, *, act, eps):
    """o = act(LayerNorm(x) @ w + b). Full K and full N per block -> LN computed once."""
    x = x_ref[...].astype(jnp.float32)
    mean = jnp.mean(x, axis=-1, keepdims=True)
    var = jnp.mean(jnp.square(x - mean), axis=-1, keepdims=True)
    xn = (x - mean) * jax.lax.rsqrt(var + eps)
    xn = xn * g_ref[...] + beta_ref[...]
    y = jnp.dot(xn.astype(jnp.bfloat16), w_ref[...], preferred_element_type=jnp.float32)
    y = y + b_ref[...]
    if act == "gelu":
        y = jax.nn.gelu(y, approximate=False)
    elif act == "relu":
        y = jnp.maximum(y, 0.0)
    o_ref[...] = y.astype(o_ref.dtype)


def _attn_kernel(qkv_ref, o_ref, *, num_heads, head_dim):
    """All heads of one batch element. qkv tile: (1, N, 3D) bf16 in column order
    [q heads | k heads | v heads] with the softmax scale already folded into q.
    Each head's output is stored directly into its lane slice of o_ref."""
    D = num_heads * head_dim
    qkv = qkv_ref[0]                                            # (N, 3D) bf16
    for h in range(num_heads):                                  # static unroll (small H)
        lo = h * head_dim
        q = qkv[:, lo:lo + head_dim]
        k = qkv[:, D + lo:D + lo + head_dim]
        v = qkv[:, 2 * D + lo:2 * D + lo + head_dim]
        s = jax.lax.dot_general(q, k, (((1,), (1,)), ((), ())),
                                preferred_element_type=jnp.float32)
        s = s - jnp.max(s, axis=-1, keepdims=True)
        p = jnp.exp(s)
        inv = pl.reciprocal(jnp.sum(p, axis=-1, keepdims=True), approx=True)
        p = (p * inv).astype(jnp.bfloat16)
        o = jnp.dot(p, v, preferred_element_type=jnp.float32)
        o_ref[0, :, lo:lo + head_dim] = o.astype(o_ref.dtype)


def _proj_res_ln_mlp1_kernel(ctx_ref, wp_ref, bp_ref, res_ref,
                             g2_ref, beta2_ref, w1_ref, b1_ref,
                             xnew_ref, h_ref, *, eps):
    """Fused: x_new = res + ctx @ Wp + bp ; h = GELU(LN(x_new) @ W1 + b1)."""
    y = jnp.dot(_bf16(ctx_ref[...]), wp_ref[...],
                preferred_element_type=jnp.float32) + bp_ref[...]
    x_new = res_ref[...] + y                                    # f32
    xnew_ref[...] = x_new.astype(xnew_ref.dtype)
    mean = jnp.mean(x_new, axis=-1, keepdims=True)
    var = jnp.mean(jnp.square(x_new - mean), axis=-1, keepdims=True)
    xn = (x_new - mean) * jax.lax.rsqrt(var + eps)
    xn = xn * g2_ref[...] + beta2_ref[...]
    hh = jnp.dot(xn.astype(jnp.bfloat16), w1_ref[...],
                 preferred_element_type=jnp.float32) + b1_ref[...]
    hh = jax.nn.gelu(hh, approximate=False)
    h_ref[...] = hh.astype(h_ref.dtype)


def _linear_residual_kernel(x_ref, w_ref, b_ref, res_ref, o_ref):
    """o = res + x @ w + b  (mlp second linear with fused residual)."""
    y = jnp.dot(_bf16(x_ref[...]), w_ref[...],
                preferred_element_type=jnp.float32) + b_ref[...]
    o_ref[...] = (res_ref[...] + y).astype(o_ref.dtype)


def _head_kernel(x_ref, w1_ref, b1_ref, w2_ref, b2_ref, w3_ref, b3_ref,
                 w4_ref, b4_ref, o_ref):
    """Fused regression head: relu(fc1) -> relu(fc2) -> relu(fc3) -> fc4, one launch."""
    def lin(h, w_ref, b_ref, relu):
        y = jnp.dot(h.astype(jnp.bfloat16), w_ref[...],
                    preferred_element_type=jnp.float32) + b_ref[...]
        return jnp.maximum(y, 0.0) if relu else y
    h = x_ref[...].astype(jnp.float32)
    h = lin(h, w1_ref, b1_ref, True)
    h = lin(h, w2_ref, b2_ref, True)
    h = lin(h, w3_ref, b3_ref, True)
    o_ref[...] = lin(h, w4_ref, b4_ref, False).astype(o_ref.dtype)


# --------------------------------------------------------------------------
# pallas_call wrappers (grid over M only; K and N kept whole -> lane-dense outputs,
# LN never recomputed, weights << VMEM at ViT sizes)
# --------------------------------------------------------------------------

_CP = lambda sem: pltpu.CompilerParams(dimension_semantics=sem,
                                       vmem_limit_bytes=VMEM_LIMIT)


def pallas_linear(x, w, b, act="none", out_dtype=jnp.float32):
    M, K = x.shape
    N = w.shape[1]
    tm = _tile(M, TILE_PREF, 16)
    return pl.pallas_call(
        functools.partial(_linear_kernel, act=act),
        out_shape=jax.ShapeDtypeStruct((M, N), out_dtype),
        grid=(M // tm,),
        in_specs=[pl.BlockSpec((tm, K), lambda i: (i, 0)),
                  pl.BlockSpec((K, N), lambda i: (0, 0)),
                  pl.BlockSpec((1, N), lambda i: (0, 0))],
        out_specs=pl.BlockSpec((tm, N), lambda i: (i, 0)),
        compiler_params=_CP(("parallel",)),
    )(x, w, b.reshape(1, N))


def pallas_ln_linear(x, g, beta, w, b, act="none", eps=1e-6, out_dtype=jnp.float32):
    M, K = x.shape
    N = w.shape[1]
    tm = _tile(M, TILE_PREF, 16)
    return pl.pallas_call(
        functools.partial(_ln_linear_kernel, act=act, eps=eps),
        out_shape=jax.ShapeDtypeStruct((M, N), out_dtype),
        grid=(M // tm,),
        in_specs=[pl.BlockSpec((tm, K), lambda i: (i, 0)),
                  pl.BlockSpec((1, K), lambda i: (0, 0)),
                  pl.BlockSpec((1, K), lambda i: (0, 0)),
                  pl.BlockSpec((K, N), lambda i: (0, 0)),
                  pl.BlockSpec((1, N), lambda i: (0, 0))],
        out_specs=pl.BlockSpec((tm, N), lambda i: (i, 0)),
        compiler_params=_CP(("parallel",)),
    )(x, g.reshape(1, K), beta.reshape(1, K), w, b.reshape(1, N))


def pallas_attention(qkv, num_heads):
    """qkv: (B, N, 3D) bf16 in [q heads | k heads | v heads] order -> (B, N, D) bf16."""
    B, N, threeD = qkv.shape
    D = threeD // 3
    hd = D // num_heads
    return pl.pallas_call(
        functools.partial(_attn_kernel, num_heads=num_heads, head_dim=hd),
        out_shape=jax.ShapeDtypeStruct((B, N, D), AT),
        grid=(B,),
        in_specs=[pl.BlockSpec((1, N, threeD), lambda b: (b, 0, 0))],
        out_specs=pl.BlockSpec((1, N, D), lambda b: (b, 0, 0)),
        compiler_params=_CP(("parallel",)),
    )(qkv)


def pallas_proj_res_ln_mlp1(ctx, wp, bp, res, g2, beta2, w1, b1, eps=1e-6):
    """Returns (x_new f32, h bf16) where x_new = res + ctx@Wp+bp and
    h = GELU(LN(x_new)@W1+b1)."""
    M, D = ctx.shape
    Hd = w1.shape[1]
    tm = _tile(M, TILE_PREF, 16)
    return pl.pallas_call(
        functools.partial(_proj_res_ln_mlp1_kernel, eps=eps),
        out_shape=(jax.ShapeDtypeStruct((M, D), jnp.float32),
                   jax.ShapeDtypeStruct((M, Hd), AT)),
        grid=(M // tm,),
        in_specs=[pl.BlockSpec((tm, D), lambda i: (i, 0)),
                  pl.BlockSpec((D, D), lambda i: (0, 0)),
                  pl.BlockSpec((1, D), lambda i: (0, 0)),
                  pl.BlockSpec((tm, D), lambda i: (i, 0)),
                  pl.BlockSpec((1, D), lambda i: (0, 0)),
                  pl.BlockSpec((1, D), lambda i: (0, 0)),
                  pl.BlockSpec((D, Hd), lambda i: (0, 0)),
                  pl.BlockSpec((1, Hd), lambda i: (0, 0))],
        out_specs=(pl.BlockSpec((tm, D), lambda i: (i, 0)),
                   pl.BlockSpec((tm, Hd), lambda i: (i, 0))),
        compiler_params=_CP(("parallel",)),
    )(ctx, wp, bp.reshape(1, D), res, g2.reshape(1, D), beta2.reshape(1, D),
      w1, b1.reshape(1, Hd))


def pallas_linear_residual(x, w, b, res):
    M, K = x.shape
    N = w.shape[1]
    tm = _tile(M, TILE_PREF, 16)
    return pl.pallas_call(
        _linear_residual_kernel,
        out_shape=jax.ShapeDtypeStruct((M, N), jnp.float32),
        grid=(M // tm,),
        in_specs=[pl.BlockSpec((tm, K), lambda i: (i, 0)),
                  pl.BlockSpec((K, N), lambda i: (0, 0)),
                  pl.BlockSpec((1, N), lambda i: (0, 0)),
                  pl.BlockSpec((tm, N), lambda i: (i, 0))],
        out_specs=pl.BlockSpec((tm, N), lambda i: (i, 0)),
        compiler_params=_CP(("parallel",)),
    )(x, w, b.reshape(1, N), res)


def pallas_head(feat, p):
    B, _ = feat.shape
    args = [feat,
            p["fc1_w"], p["fc1_b"].reshape(1, -1),
            p["fc2_w"], p["fc2_b"].reshape(1, -1),
            p["fc3_w"], p["fc3_b"].reshape(1, -1),
            p["fc4_w"], p["fc4_b"].reshape(1, -1)]
    return pl.pallas_call(
        _head_kernel,
        out_shape=jax.ShapeDtypeStruct((B, 2), jnp.float32),
        grid=(1,),
        in_specs=[pl.BlockSpec(a.shape, lambda i: (0, 0)) for a in args],
        out_specs=pl.BlockSpec((B, 2), lambda i: (0, 0)),
        compiler_params=pltpu.CompilerParams(vmem_limit_bytes=VMEM_LIMIT),
    )(*args)


# --------------------------------------------------------------------------
# Model (synthetic deterministic weights, same structure as the torch module)
# TODO(synk): pretrained timm 'vit_small_patch16_224' weights cannot be loaded in-script;
#             synthetic weights with the same shapes/structure are used instead.
# --------------------------------------------------------------------------

def init_vit_params(key, *, in_chans, patch, embed_dim, depth, mlp_ratio,
                    num_patches, num_heads):
    def normal(k, shape, std=0.02):
        return std * jax.random.normal(k, shape, dtype=jnp.float32)

    keys = iter(jax.random.split(key, 8 + 8 * depth))
    hidden = embed_dim * mlp_ratio
    hd = embed_dim // num_heads
    scale = hd ** -0.5
    p = {
        # Conv2d(in_chans, embed_dim, kernel=patch, stride=patch) as a matmul
        "patch_w": normal(next(keys), (patch * patch * in_chans, embed_dim)).astype(WT),
        "patch_b": jnp.zeros((embed_dim,), jnp.float32),
        # pos_embed includes a cls slot (like the real (1, 197, 384) table)
        "pos_embed": normal(next(keys), (1, num_patches + 1, embed_dim)),
        "blocks": [],
    }
    for _ in range(depth):
        qkv_f32 = normal(next(keys), (embed_dim, 3 * embed_dim))
        qkv_b = jnp.zeros((3 * embed_dim,), jnp.float32)
        # fold the softmax scale (1/sqrt(hd)) into the q columns -> no in-kernel multiply
        qkv_f32 = qkv_f32.at[:, :embed_dim].multiply(scale)
        qkv_b = qkv_b.at[:embed_dim].multiply(scale)
        proj_f32 = normal(next(keys), (embed_dim, embed_dim))
        proj_b = jnp.zeros((embed_dim,), jnp.float32)
        p["blocks"].append(dict(
            ln1_g=jnp.ones((embed_dim,), jnp.float32),
            ln1_b=jnp.zeros((embed_dim,), jnp.float32),
            qkv_w=qkv_f32.astype(WT),
            qkv_b=qkv_b,
            proj_w=proj_f32.astype(WT),
            proj_b=proj_b,
            # hook score = mean over D of the proj output, computed algebraically:
            # mean_j(x@W+b) = x @ mean_j(W) + mean(b)
            proj_w_mean=proj_f32.mean(axis=1),
            proj_b_mean=proj_b.mean(),
            ln2_g=jnp.ones((embed_dim,), jnp.float32),
            ln2_b=jnp.zeros((embed_dim,), jnp.float32),
            mlp1_w=normal(next(keys), (embed_dim, hidden)).astype(WT),
            mlp1_b=jnp.zeros((hidden,), jnp.float32),
            mlp2_w=normal(next(keys), (hidden, embed_dim)).astype(WT),
            mlp2_b=jnp.zeros((embed_dim,), jnp.float32),
        ))
    # regression head fc1..fc4 from the torch module
    p["fc1_w"] = normal(next(keys), (embed_dim, 512)).astype(WT); p["fc1_b"] = jnp.zeros((512,), jnp.float32)
    p["fc2_w"] = normal(next(keys), (512, 256)).astype(WT);       p["fc2_b"] = jnp.zeros((256,), jnp.float32)
    p["fc3_w"] = normal(next(keys), (256, 128)).astype(WT);       p["fc3_b"] = jnp.zeros((128,), jnp.float32)
    p["fc4_w"] = normal(next(keys), (128, 2)).astype(WT);         p["fc4_b"] = jnp.zeros((2,), jnp.float32)
    return p


def patch_embed(x_nchw, w, b, patch):
    """Conv2d(C, D, kernel=patch, stride=patch) == patch extraction + matmul."""
    B, C, H, W = x_nchw.shape
    gh, gw = H // patch, W // patch
    x = x_nchw.reshape(B, C, gh, patch, gw, patch)
    x = x.transpose(0, 2, 4, 1, 3, 5)                    # (B, gh, gw, C, p, p)
    x = x.reshape(B * gh * gw, C * patch * patch)        # matches torch weight flatten order
    y = pallas_linear(x, w, b)
    return y.reshape(B, gh * gw, -1)


def block_forward(bp, x, num_heads):
    """timm Block (eval): x += attn(ln1(x)); x += mlp(ln2(x)).
    Returns (x, scores) with scores == hooked attention_scores.mean(-1)."""
    B, N, D = x.shape
    x2 = x.reshape(B * N, D)

    # ln1 fused into qkv matmul; qkv slab stored bf16
    qkv = pallas_ln_linear(x2, bp["ln1_g"], bp["ln1_b"], bp["qkv_w"], bp["qkv_b"],
                           out_dtype=AT)                                     # (B*N, 3D) bf16
    # attention directly on the (B, N, 3D) slab -- no head-split transposes
    ctx = pallas_attention(qkv.reshape(B, N, 3 * D), num_heads)              # (B, N, D) bf16
    ctx2 = ctx.reshape(B * N, D)
    # hooked score = mean over D of the proj output, as a tiny XLA matvec
    scores = ctx2.astype(jnp.float32) @ bp["proj_w_mean"] + bp["proj_b_mean"]  # (B*N,)
    # proj + residual + ln2 + mlp1 + exact GELU fused in one launch
    x_new, h = pallas_proj_res_ln_mlp1(ctx2, bp["proj_w"], bp["proj_b"], x2,
                                       bp["ln2_g"], bp["ln2_b"],
                                       bp["mlp1_w"], bp["mlp1_b"])
    # mlp fc2 fused with the residual add
    x_out = pallas_linear_residual(h, bp["mlp2_w"], bp["mlp2_b"], x_new)
    return x_out.reshape(B, N, D), scores.reshape(B, N)


def vit_forward(params, x_nchw, *, num_heads, patch, top_k=1.0):
    x = patch_embed(x_nchw, params["patch_w"], params["patch_b"], patch)
    B, N, D = x.shape
    pos = params["pos_embed"]
    # original: drop the cls positional slot when pos has one extra token
    if pos.shape[1] == N + 1 and x.shape[1] == N:
        pos = pos[:, 1:, :]
    x = x + pos                                                    # pos_drop identity (eval)

    for i, bp in enumerate(params["blocks"]):
        x, scores = block_forward(bp, x, num_heads)                # scores: (B, N_cur)
        if i % 2 == 1:
            # score_method == 'attention'; token pruning bookkeeping kept in plain XLA
            n_cur = x.shape[1]
            k_keep = int(top_k * scores.shape[1])
            # torch.topk(largest=True).indices == argsort descending (ties may differ)
            order = jnp.argsort(-scores, axis=1)
            topk_idx = order[:, :k_keep]
            informative = jnp.take_along_axis(x, topk_idx[:, :, None], axis=1)
            n_non = n_cur - k_keep
            if n_non > 0:
                batch_idx = jnp.arange(B)[:, None]
                mask = jnp.ones(scores.shape, dtype=bool).at[batch_idx, topk_idx].set(False)
                # non-informative tokens, kept in original sequence order (boolean-mask order)
                pos_key = jnp.where(mask, jnp.arange(n_cur)[None, :],
                                    n_cur + jnp.arange(n_cur)[None, :])
                non_idx = jnp.argsort(pos_key, axis=1)[:, :n_non]
                non_tokens = jnp.take_along_axis(x, non_idx[:, :, None], axis=1)
                non_scores = jnp.take_along_axis(scores, non_idx, axis=1)
                weighted_sum = (non_tokens * non_scores[:, :, None]).sum(axis=1)
                sum_scores = jnp.maximum(non_scores.sum(axis=1, keepdims=True), 1e-5)
                package = weighted_sum / (sum_scores + 1e-5)       # matches torch double-eps
                x = jnp.concatenate([informative, package[:, None, :]], axis=1)
            else:
                x = informative

    features = x.mean(axis=1)                                      # (B, D)
    return pallas_head(features, params)                           # (B, 2), fused fc1..fc4


# --------------------------------------------------------------------------

if __name__ == "__main__":
    # small config consistent with the module: 1-channel image, 16x16 patches,
    # ViT blocks with mlp_ratio 4, head MLP 512->256->128->2
    B, C, H, W = 2, 1, 32, 32
    patch = 16
    embed_dim = 64
    num_heads = 4
    depth = 4                     # num_layers (small); default in module is 12
    num_patches = (H // patch) * (W // patch)

    key = jax.random.PRNGKey(0)
    kx, kp = jax.random.split(key)
    x = jax.random.normal(kx, (B, C, H, W), dtype=jnp.float32)
    params = init_vit_params(kp, in_chans=C, patch=patch, embed_dim=embed_dim,
                             depth=depth, mlp_ratio=4, num_patches=num_patches,
                             num_heads=num_heads)

    out = vit_forward(params, x, num_heads=num_heads, patch=patch, top_k=1.0)
    out = jax.block_until_ready(out)
    assert out.shape == (B, 2) and out.dtype == jnp.float32
    print("KERNEL_OK")
</pallas_src>

<mosaic_0001>
module attributes {stable_mosaic.version = 11 : i64} {
  func.func @_linear_kernel(%arg0: i32, %arg1: memref<8x256xf32, #tpu.memory_space<vmem>>, %arg2: memref<256x64xbf16, #tpu.memory_space<vmem>>, %arg3: memref<1x64xf32, #tpu.memory_space<vmem>>, %arg4: memref<8x64xf32, #tpu.memory_space<vmem>>) attributes {dimension_semantics = [#tpu.dimension_semantics<parallel>], iteration_bounds = array<i64: 1>, scalar_prefetch = 0 : i64, scratch_operands = 0 : i64, tpu.core_type = #tpu.core_type<tc>, window_params = [{transform_indices = @transform_0, window_bounds = array<i64: 8, 256>}, {pipeline_mode = #tpu.pipeline_mode<synchronous>, transform_indices = @transform_1, window_bounds = array<i64: 256, 64>}, {pipeline_mode = #tpu.pipeline_mode<synchronous>, transform_indices = @transform_2, window_bounds = array<i64: 1, 64>}, {transform_indices = @transform_3, window_bounds = array<i64: 8, 64>}]} {
    %c0 = arith.constant 0 : index
    %c0_0 = arith.constant 0 : index
    %0 = vector.load %arg1[%c0, %c0_0] : memref<8x256xf32, #tpu.memory_space<vmem>>, vector<8x256xf32>
    %1 = arith.truncf %0 : vector<8x256xf32> to vector<8x256xbf16>
    %c0_1 = arith.constant 0 : index
    %c0_2 = arith.constant 0 : index
    %2 = vector.load %arg2[%c0_1, %c0_2] : memref<256x64xbf16, #tpu.memory_space<vmem>>, vector<256x64xbf16>
    %cst = arith.constant dense<0.000000e+00> : vector<8x64xf32>
    %3 = tpu.matmul %1, %2, %cst {dimension_numbers = #tpu.dot_dimension_numbers<[1], [0], [0], [1], [0, 0, 1, 1], [], []>} : vector<8x256xbf16>, vector<256x64xbf16>, vector<8x64xf32> -> vector<8x64xf32>
    %c0_3 = arith.constant 0 : index
    %c0_4 = arith.constant 0 : index
    %4 = vector.load %arg3[%c0_3, %c0_4] : memref<1x64xf32, #tpu.memory_space<vmem>>, vector<1x64xf32>
    %5 = vector.broadcast %4 : vector<1x64xf32> to vector<8x64xf32>
    %6 = arith.addf %3, %5 : vector<8x64xf32>
    %c0_5 = arith.constant 0 : index
    %c0_6 = arith.constant 0 : index
    %7 = vector.load %arg4[%c0_5, %c0_6] : memref<8x64xf32, #tpu.memory_space<vmem>>, vector<8x64xf32>
    tpu.vector_store %arg4[%c0_5, %c0_6], %6 {strides = array<i32>} : memref<8x64xf32, #tpu.memory_space<vmem>>, vector<8x64xf32>,
    return
  }
  func.func @transform_0(%arg0: i32) -> (i32, i32) {
    %c0_i32 = arith.constant 0 : i32
    %c0_i32_0 = arith.constant 0 : i32
    return %arg0, %c0_i32 : i32, i32
  }
  func.func @transform_1(%arg0: i32) -> (i32, i32) {
    %c0_i32 = arith.constant 0 : i32
    %c0_i32_0 = arith.constant 0 : i32
    %c0_i32_1 = arith.constant 0 : i32
    return %c0_i32, %c0_i32_0 : i32, i32
  }
  func.func @transform_2(%arg0: i32) -> (i32, i32) {
    %c0_i32 = arith.constant 0 : i32
    %c0_i32_0 = arith.constant 0 : i32
    %c0_i32_1 = arith.constant 0 : i32
    return %c0_i32, %c0_i32_0 : i32, i32
  }
  func.func @transform_3(%arg0: i32) -> (i32, i32) {
    %c0_i32 = arith.constant 0 : i32
    %c0_i32_0 = arith.constant 0 : i32
    return %arg0, %c0_i32 : i32, i32
  }
}

</mosaic_0001>

<llo_original>
// kernel: tpu_custom_call.1
$region0: #{tpu_custom_call.1}
  #allocation0 [shape = 'u32[]', space=smem, size = 0x4, offset = 0x4, fixed_abs, tag = 'smem constant byte address 0x4 - core index']
  #allocation1 [shape = 'u32[144,128]{1,0:T(1,128)}', space=vmem, size = 0x12000, scoped, tag = 'internal scratch']
  %s0 = inlined_call_operand.vmem [shape: f32[8,256], index: 0, kind: input, shape index: {}]
  %s1 = inlined_call_operand.vmem [shape: bf16[256,64], index: 1, kind: input, shape index: {}]
  %s2 = inlined_call_operand.vmem [shape: f32[1,64], index: 2, kind: input, shape index: {}]
  %s3 = inlined_call_operand.hbm [shape: f32[8,64], index: 3, kind: output, shape index: {}]
  %s4 = sld [smem:[#allocation0]]
  $region22: #{tpu_custom_call.1} parent=0
    _
  %s6 = ssub.s32 1, %s4
  %s7 = scalar_select 0, %s6, %s4
  $region1: #{tpu_custom_call.1} parent=0
    #allocation2 [shape = 'u8[4096]{0}', space=vmem, size = 0x1000, scoped, tag = 'output window, operand 0, single buffered']
    #allocation3 [shape = 's32[1]{0}', space=sflag, size = 0x4, scoped, tag = 'scoped memory for tpu_custom_call.1']
    %8 = vsyncpa [#allocation3], 0
    // Predicated region
    $region2: #{tpu_custom_call.1} parent=1 // pred_check
      _
    $region3: #{tpu_custom_call.1} parent=1 // pred_check_branch
      %10 = sbr.rel (0) target = $region5
    $region4: #{tpu_custom_call.1} parent=1 // pred_region
      _
    $region5: #{tpu_custom_call.1} parent=1 // pred_fallthru
      _
    // Predicated region
    $region6: #{tpu_custom_call.1} parent=1 // pred_check
      _
    $region7: #{tpu_custom_call.1} parent=1 // pred_check_branch
      %12 = sbr.rel (0) target = $region9
    $region8: #{tpu_custom_call.1} parent=1 // pred_region
      _
    $region9: #{tpu_custom_call.1} parent=1 // pred_fallthru
      _
    // Predicated region
    $region10: #{tpu_custom_call.1} parent=1 // pred_check
      _
    $region11: #{tpu_custom_call.1} parent=1 // pred_check_branch
      %14 = sbr.rel (0) target = $region13
    $region12: #{tpu_custom_call.1} parent=1 // pred_region
      _
    $region13: #{tpu_custom_call.1} parent=1 // pred_fallthru
      _
    %v16 = vld [vmem:[%s0] sm:$0xff]
    %v17 = vld [vmem:[%s0 + $0x8] sm:$0xff]
    %v18 = vpack.c.bf16 %v16, %v16
    %v19 = vpack.c.bf16 %v17, %v17
    %v20 = vld [vmem:[%s1] sm:$0xf]
    %v21 = vld [vmem:[%s1 + $0x4] sm:$0xf]
    %v22 = vld [vmem:[%s1 + $0x8] sm:$0xf]
    %v23 = vld [vmem:[%s1 + $0xc] sm:$0xf]
    %v24 = vld [vmem:[%s1 + $0x10] sm:$0xf]
    %v25 = vld [vmem:[%s1 + $0x14] sm:$0xf]
    %v26 = vld [vmem:[%s1 + $0x18] sm:$0xf]
    %v27 = vld [vmem:[%s1 + $0x1c] sm:$0xf]
    %v28 = vld [vmem:[%s1 + $0x20] sm:$0xf]
    %v29 = vld [vmem:[%s1 + $0x24] sm:$0xf]
    %v30 = vld [vmem:[%s1 + $0x28] sm:$0xf]
    %v31 = vld [vmem:[%s1 + $0x2c] sm:$0xf]
    %v32 = vld [vmem:[%s1 + $0x30] sm:$0xf]
    %v33 = vld [vmem:[%s1 + $0x34] sm:$0xf]
    %v34 = vld [vmem:[%s1 + $0x38] sm:$0xf]
    %v35 = vld [vmem:[%s1 + $0x3c] sm:$0xf]
    %v36 = vld [vmem:[%s1 + $0x40] sm:$0xf]
    %v37 = vld [vmem:[%s1 + $0x44] sm:$0xf]
    %v38 = vld [vmem:[%s1 + $0x48] sm:$0xf]
    %v39 = vld [vmem:[%s1 + $0x4c] sm:$0xf]
    %v40 = vld [vmem:[%s1 + $0x50] sm:$0xf]
    %v41 = vld [vmem:[%s1 + $0x54] sm:$0xf]
    %v42 = vld [vmem:[%s1 + $0x58] sm:$0xf]
    %v43 = vld [vmem:[%s1 + $0x5c] sm:$0xf]
    %v44 = vld [vmem:[%s1 + $0x60] sm:$0xf]
    %v45 = vld [vmem:[%s1 + $0x64] sm:$0xf]
    %v46 = vld [vmem:[%s1 + $0x68] sm:$0xf]
    %v47 = vld [vmem:[%s1 + $0x6c] sm:$0xf]
    %v48 = vld [vmem:[%s1 + $0x70] sm:$0xf]
    %v49 = vld [vmem:[%s1 + $0x74] sm:$0xf]
    %v50 = vld [vmem:[%s1 + $0x78] sm:$0xf]
    %v51 = vld [vmem:[%s1 + $0x7c] sm:$0xf]
    %v52 = vld [vmem:[%s2] sm:$0x1]
    %v54 = vlaneseq
    %v55 = vshrl.u32 %v54, 7
    %v56 = vsub.s32 0, %v55
    %v57 = vrot.slane %v52, %v56
    %v91 = vunpack.c.l.b16 %v20
    %v92 = vunpack.c.l.b16 %v21
    %v93 = vunpack.c.l.b16 %v22
    %v94 = vunpack.c.l.b16 %v23
    %v95 = vunpack.c.l.b16 %v24
    %v96 = vunpack.c.l.b16 %v25
    %v97 = vunpack.c.l.b16 %v26
    %v98 = vunpack.c.l.b16 %v27
    %v99 = vunpack.c.l.b16 %v28
    %v100 = vunpack.c.l.b16 %v29
    %v101 = vunpack.c.l.b16 %v30
    %v102 = vunpack.c.l.b16 %v31
    %v103 = vunpack.c.l.b16 %v32
    %v104 = vunpack.c.l.b16 %v33
    %v105 = vunpack.c.l.b16 %v34
    %v106 = vunpack.c.l.b16 %v35
    %v107 = vunpack.c.l.b16 %v36
    %v108 = vunpack.c.l.b16 %v37
    %v109 = vunpack.c.l.b16 %v38
    %v110 = vunpack.c.l.b16 %v39
    %v111 = vunpack.c.l.b16 %v40
    %v112 = vunpack.c.l.b16 %v41
    %v113 = vunpack.c.l.b16 %v42
    %v114 = vunpack.c.l.b16 %v43
    %v115 = vunpack.c.l.b16 %v44
    %v116 = vunpack.c.l.b16 %v45
    %v117 = vunpack.c.l.b16 %v46
    %v118 = vunpack.c.l.b16 %v47
    %v119 = vunpack.c.l.b16 %v48
    %v120 = vunpack.c.l.b16 %v49
    %v121 = vunpack.c.l.b16 %v50
    %v122 = vunpack.c.l.b16 %v51
    %v123 = vpack.c.b16 %v92, %v91
    %v124 = vpack.c.b16 %v94, %v93
    %v125 = vpack.c.b16 %v96, %v95
    %v126 = vpack.c.b16 %v98, %v97
    %v127 = vpack.c.b16 %v100, %v99
    %v128 = vpack.c.b16 %v102, %v101
    %v129 = vpack.c.b16 %v104, %v103
    %v130 = vpack.c.b16 %v106, %v105
    %v131 = vpack.c.b16 %v108, %v107
    %v132 = vpack.c.b16 %v110, %v109
    %v133 = vpack.c.b16 %v112, %v111
    %v134 = vpack.c.b16 %v114, %v113
    %v135 = vpack.c.b16 %v116, %v115
    %v136 = vpack.c.b16 %v118, %v117
    %v137 = vpack.c.b16 %v120, %v119
    %v138 = vpack.c.b16 %v122, %v121
    %155 = vmatprep.subr.bf16.mxu0 0
    %156 = vmatpush1.bf16.msra.mxu0 %v123
    %157 = vmatprep.subr.bf16.mxu0 0
    %158 = vmatpush1.bf16.msra.mxu0 %v124
    %159 = vmatprep.subr.bf16.mxu0 0
    %160 = vmatpush1.bf16.msra.mxu0 %v125
    %161 = vmatprep.subr.bf16.mxu0 0
    %162 = vmatpush1.bf16.msra.mxu0 %v126
    %163 = vmatprep.subr.bf16.mxu0 0
    %164 = vmatpush1.bf16.msra.mxu0 %v127
    %165 = vmatprep.subr.bf16.mxu0 0
    %166 = vmatpush1.bf16.msra.mxu0 %v128
    %167 = vmatprep.subr.bf16.mxu0 0
    %168 = vmatpush1.bf16.msra.mxu0 %v129
    %169 = vmatprep.subr.bf16.mxu0 0
    %170 = vmatpush1.bf16.msra.mxu0 %v130
    %171 = vmatprep.subr.bf16.mxu0 0
    %172 = vmatpush1.bf16.msra.mxu0 %v131
    %173 = vmatprep.subr.bf16.mxu0 0
    %174 = vmatpush1.bf16.msra.mxu0 %v132
    %175 = vmatprep.subr.bf16.mxu0 0
    %176 = vmatpush1.bf16.msra.mxu0 %v133
    %177 = vmatprep.subr.bf16.mxu0 0
    %178 = vmatpush1.bf16.msra.mxu0 %v134
    %179 = vmatprep.subr.bf16.mxu0 0
    %180 = vmatpush1.bf16.msra.mxu0 %v135
    %181 = vmatprep.subr.bf16.mxu0 0
    %182 = vmatpush1.bf16.msra.mxu0 %v136
    %183 = vmatprep.subr.bf16.mxu0 0
    %184 = vmatpush1.bf16.msra.mxu0 %v137
    %185 = vmatprep.subr.bf16.mxu0 0
    %186 = vmatpush1.bf16.msra.mxu0 %v138
    %187 = vmatprep.mubr.bf16.mxu0 %v19
    %188 = vmatmul.mubr.bf16.gmra.mrb[0].mxu0 %v18
    %v189 = vpop.f32.mrb[0].mxu0
    %v190 = vadd.f32 %v57, %v189
    %v191 = vpop.f32.mrb[0].mxu0
    %v192 = vpop.f32.mrb[0].mxu0
    %v193 = vpop.f32.mrb[0].mxu0
    %194 = vdwg.mxu0
    %vm195 = vcmask 523264
    %196 = vst.msk [vmem:[#allocation2] sm:$0xff] %vm195, %v190
    // Predicated region
    $region14: #{tpu_custom_call.1} parent=1 // pred_check
      _
    $region15: #{tpu_custom_call.1} parent=1 // pred_check_branch
      %198 = sbr.rel (0) target = $region17
    $region16: #{tpu_custom_call.1} parent=1 // pred_region
      %s200 = ssub.s32 128, 128
      %201 = vsyncadd [#allocation3], %s200
      %s203 = sshll.u32 [#allocation2], 4
      %s204 = int_to_ptr.vmem [resolvable:$true] %s203
      %206 = dma.vmem_to_hbm [thread:$0]  %s204, 128, %s3, [#allocation3]
    $region17: #{tpu_custom_call.1} parent=1 // pred_fallthru
      _
    // Predicated region
    $region18: #{tpu_custom_call.1} parent=1 // pred_check
      _
    $region19: #{tpu_custom_call.1} parent=1 // pred_check_branch
      %208 = sbr.rel (0) target = $region21
    $region20: #{tpu_custom_call.1} parent=1 // pred_region
      %209 = dma.done [#allocation3], 128
    $region21: #{tpu_custom_call.1} parent=1 // pred_fallthru
      _
    %210 = vsyncpa [#allocation3], 1

</llo_original>
